<compile_context>
chip_gen: v6e
topology: v6e:2x2x1
jax: 0.10.0
libtpu: 0.0.40
codegen_flags: <defaults>
</compile_context>

<pallas_src>
import jax
import jax.numpy as jnp
from jax import lax
from jax.experimental import pallas as pl
from jax.experimental.pallas import tpu as pltpu

_NEG_BIG = -1e30


def _round_up(x, m):
    return ((x + m - 1) // m) * m


def _make_kernel(batch, tile_b, inv_temp, has_pad, fixed_shift, mm_precision):
    def kernel(T_ref, y_s_ref, y_t_ref, f_s_ref, f_tk_ref,
               kl_ref, ce_ref, l_ref, diag_ref, m_ref):
        # Program ids are read ONLY at the top level (reading them inside a pl.when body
        # does not lower in interpret mode); the pl.when bodies close over these values.
        q_idx = pl.program_id(0)
        k_idx = pl.program_id(1)
        nk = pl.num_programs(1)

        # ---- per-query-tile init: reset the running logsumexp state ----
        @pl.when(k_idx == 0)
        def _init():
            l_ref[...] = jnp.zeros_like(l_ref)
            if not fixed_shift:
                m_ref[...] = jnp.full_like(m_ref, -jnp.inf)

        # ---- contrastive logits for this (query tile, key tile): [blk,D] @ [D,blk] ----
        # Operands are pre-normalized + pre-cast + pre-transposed in the wrapper, so this
        # is a bare MXU matmul with f32 accumulation.
        logits = jnp.dot(f_s_ref[...], f_tk_ref[...],
                         preferred_element_type=jnp.float32,
                         precision=mm_precision) * inv_temp

        # The positive (diagonal) logit lives in the k == q tile: grab it from the logits
        # already in registers instead of streaming a second, q-aligned copy of f_t.
        @pl.when(k_idx == q_idx)
        def _grab_diag():
            rid = lax.broadcasted_iota(jnp.int32, logits.shape, 0)
            cid = lax.broadcasted_iota(jnp.int32, logits.shape, 1)
            diag_ref[...] = jnp.sum(jnp.where(rid == cid, logits, 0.0),
                                    axis=-1, keepdims=True)

        if has_pad:  # compiled out entirely when B is tile-aligned
            col = k_idx * tile_b + lax.broadcasted_iota(jnp.int32, logits.shape, 1)
            logits = jnp.where(col < batch, logits, _NEG_BIG)

        if fixed_shift:
            # |cosine| <= 1  =>  logits in [-inv_temp, inv_temp]: a fixed shift keeps the
            # logsumexp stable and removes the per-step row max / compare / rescale.
            l_ref[...] += jnp.sum(jnp.exp(logits - inv_temp), axis=-1, keepdims=True)
        else:
            m_prev = m_ref[...]
            m_new = jnp.maximum(m_prev, jnp.max(logits, axis=-1, keepdims=True))
            l_ref[...] = (jnp.exp(m_prev - m_new) * l_ref[...]
                          + jnp.sum(jnp.exp(logits - m_new), axis=-1, keepdims=True))
            m_ref[...] = m_new

        # ---- finalize this query tile: CE rows + KL rows, write lane-broadcast partials ----
        @pl.when(k_idx == nk - 1)
        def _finalize():
            if fixed_shift:
                lse = inv_temp + jnp.log(l_ref[...])
            else:
                lse = m_ref[...] + jnp.log(l_ref[...])
            ce_rows = lse - diag_ref[...]

            # KL(teacher || student) softened by the runtime learnable scalar T.
            T = T_ref[0]
            inv_T = 1.0 / T
            ys = y_s_ref[...].astype(jnp.float32) * inv_T
            yt = y_t_ref[...].astype(jnp.float32) * inv_T
            ys = ys - jnp.max(ys, axis=-1, keepdims=True)
            log_den_s = jnp.log(jnp.sum(jnp.exp(ys), axis=-1, keepdims=True))
            yt = yt - jnp.max(yt, axis=-1, keepdims=True)
            e_t = jnp.exp(yt)
            den_t = jnp.sum(e_t, axis=-1, keepdims=True)
            log_den_t = jnp.log(den_t)
            p_t = e_t / den_t
            kl_rows = jnp.sum(p_t * ((yt - log_den_t) - (ys - log_den_s)),
                              axis=-1, keepdims=True)

            if has_pad:
                row = q_idx * tile_b + lax.broadcasted_iota(jnp.int32, (tile_b, 1), 0)
                valid = row < batch
                ce_rows = jnp.where(valid, ce_rows, 0.0)
                kl_rows = jnp.where(valid, kl_rows, 0.0)

            # Lane-broadcast the scalar partials -> dense (unmasked) stores.
            kl_ref[...] = jnp.broadcast_to(jnp.sum(kl_rows), kl_ref.shape)
            ce_ref[...] = jnp.broadcast_to(jnp.sum(ce_rows), ce_ref.shape)

    return kernel


def contrastive_distill_kl(f_s, f_t, y_s, y_t, T, temperature=0.07, *,
                           block_b=256, matmul_dtype=jnp.bfloat16,
                           vmem_limit_bytes=None, use_fixed_shift=None,
                           single_buffer_query_streams=False):
    """Pallas implementation of ContrastiveDistillKL.forward. Returns the scalar loss."""
    # Glue: mimic .unsqueeze(0) for 1-D inputs.
    if f_s.ndim == 1:
        f_s = f_s[None, :]
    if f_t.ndim == 1:
        f_t = f_t[None, :]
    if y_s.ndim == 1:
        y_s = y_s[None, :]
    if y_t.ndim == 1:
        y_t = y_t[None, :]

    B, D = f_s.shape
    C = y_s.shape[-1]

    # ---- hoisted out of the kernel's inner loop: normalize once, cast once, transpose keys ----
    def _l2n(x):
        x = x.astype(jnp.float32)
        return x * lax.rsqrt(jnp.maximum(jnp.sum(x * x, axis=-1, keepdims=True), 1e-24))

    f_s_n = _l2n(f_s).astype(matmul_dtype)
    f_t_n = _l2n(f_t).astype(matmul_dtype)

    # ---- tiling policy ----
    if B <= 128:
        # Single tile: the key block spans the full lane extent, so any 8-aligned blk is legal.
        blk = _round_up(max(B, 8), 8)
    else:
        # blk must be a multiple of 128 (lane dim of the transposed key tile); aim for >= 2
        # query tiles so both v7x TensorCores get work on the "parallel" q axis.
        blk = max(128, _round_up(min(int(block_b), -(-B // 2)), 128))
    Bp = _round_up(B, blk)
    n = Bp // blk
    has_pad = (Bp != B)

    def pad_rows(x):
        return x if x.shape[0] == Bp else jnp.pad(x, ((0, Bp - x.shape[0]), (0, 0)))

    y_s_p, y_t_p = pad_rows(y_s), pad_rows(y_t)
    f_s_p = pad_rows(f_s_n)
    f_t_T = pad_rows(f_t_n).T                     # (D, Bp): no per-step transpose in-kernel
    T_arr = jnp.asarray(T, dtype=jnp.float32).reshape((1,))

    inv_temp = 1.0 / float(temperature)
    if use_fixed_shift is None:
        # exp(-2/temperature) must stay a normal f32 for the fixed-shift logsumexp.
        use_fixed_shift = (2.0 * inv_temp) < 70.0
    mm_precision = (lax.Precision.HIGHEST
                    if jnp.dtype(matmul_dtype) == jnp.dtype(jnp.float32) else None)

    if vmem_limit_bytes is None:
        isz = lambda a: jnp.dtype(a.dtype).itemsize
        stream = (blk * C * (isz(y_s_p) + isz(y_t_p))
                  + blk * D * isz(f_s_p) + D * blk * isz(f_t_T))
        est = 2 * stream + 3 * blk * blk * 4 + 8 * blk * 4 + (2 << 20)
        vmem_limit_bytes = int(min(64 << 20, max(32 << 20, 2 * est)))

    # Optional single-buffering of the q-constant streams (their block index only changes
    # every n inner steps) -- useful on v7x's smaller VMEM; off by default.
    q_kw = ({"pipeline_mode": pl.Buffered(1)} if single_buffer_query_streams else {})

    kernel = _make_kernel(batch=B, tile_b=blk, inv_temp=inv_temp, has_pad=has_pad,
                          fixed_shift=use_fixed_shift, mm_precision=mm_precision)

    kl_parts, ce_parts = pl.pallas_call(
        kernel,
        out_shape=(jax.ShapeDtypeStruct((n, 1, 128), jnp.float32),
                   jax.ShapeDtypeStruct((n, 1, 128), jnp.float32)),
        grid_spec=pltpu.PrefetchScalarGridSpec(
            num_scalar_prefetch=0,
            grid=(n, n),
            in_specs=[
                pl.BlockSpec(memory_space=pltpu.MemorySpace.SMEM),      # T (runtime scalar)
                pl.BlockSpec((blk, C), lambda q, k: (q, 0), **q_kw),    # y_s  (query rows)
                pl.BlockSpec((blk, C), lambda q, k: (q, 0), **q_kw),    # y_t
                pl.BlockSpec((blk, D), lambda q, k: (q, 0), **q_kw),    # f_s  (pre-normalized)
                pl.BlockSpec((D, blk), lambda q, k: (0, k)),            # f_t^T (pre-normalized keys)
            ],
            out_specs=(
                pl.BlockSpec((1, 1, 128), lambda q, k: (q, 0, 0)),      # KL partial per q tile
                pl.BlockSpec((1, 1, 128), lambda q, k: (q, 0, 0)),      # CE partial per q tile
            ),
            scratch_shapes=[
                pltpu.VMEM((blk, 1), jnp.float32),   # running row sum-exp
                pltpu.VMEM((blk, 1), jnp.float32),   # diagonal (positive) logit
                pltpu.VMEM((blk, 1), jnp.float32),   # running row max (online fallback only)
            ],
        ),
        compiler_params=pltpu.CompilerParams(
            dimension_semantics=("parallel", "arbitrary"),
            vmem_limit_bytes=vmem_limit_bytes),
    )(T_arr, y_s_p, y_t_p, f_s_p, f_t_T)

    T_f = jnp.asarray(T, jnp.float32)
    kl_sum = jnp.sum(kl_parts[:, 0, 0])
    ce_sum = jnp.sum(ce_parts[:, 0, 0])
    return kl_sum * (T_f * T_f) / B + ce_sum / B


def _reference(f_s, f_t, y_s, y_t, T, temperature=0.07, matmul_dtype=jnp.float32):
    """Pure-JAX reference mirroring the PyTorch module."""
    if f_s.ndim == 1:
        f_s = f_s[None, :]
    if f_t.ndim == 1:
        f_t = f_t[None, :]
    if y_s.ndim == 1:
        y_s = y_s[None, :]
    if y_t.ndim == 1:
        y_t = y_t[None, :]
    B = y_s.shape[0]
    T = jnp.asarray(T, jnp.float32)
    log_p_s = jax.nn.log_softmax(y_s.astype(jnp.float32) / T, axis=-1)
    p_t = jax.nn.softmax(y_t.astype(jnp.float32) / T, axis=-1)
    log_p_t = jax.nn.log_softmax(y_t.astype(jnp.float32) / T, axis=-1)
    kl = jnp.sum(p_t * (log_p_t - log_p_s)) / B * T ** 2
    fs = f_s / jnp.maximum(jnp.linalg.norm(f_s, axis=-1, keepdims=True), 1e-12)
    ft = f_t / jnp.maximum(jnp.linalg.norm(f_t, axis=-1, keepdims=True), 1e-12)
    logits = jnp.dot(fs.astype(matmul_dtype), ft.astype(matmul_dtype).T,
                     preferred_element_type=jnp.float32,
                     precision=lax.Precision.HIGHEST) / temperature
    lp = jax.nn.log_softmax(logits, axis=-1)
    ce = -jnp.mean(jnp.diagonal(lp))
    return kl + ce


if __name__ == "__main__":
    initial_T = 4.0        # learnable nn.Parameter in the PyTorch module (runtime scalar here)
    temperature = 0.07     # fixed constructor constant (baked in at trace time)

    key = jax.random.PRNGKey(0)
    k1, k2, k3, k4 = jax.random.split(key, 4)

    B, D, C = 2, 32, 16
    f_s = jax.random.normal(k1, (B, D), dtype=jnp.float32)
    f_t = jax.random.normal(k2, (B, D), dtype=jnp.float32)
    y_s = jax.random.normal(k3, (B, C), dtype=jnp.float32)
    y_t = jax.random.normal(k4, (B, C), dtype=jnp.float32)

    # Case 1: tiny batch (single padded tile), f32 MXU path.
    out_f32 = jax.block_until_ready(
        contrastive_distill_kl(f_s, f_t, y_s, y_t, initial_T, temperature,
                               matmul_dtype=jnp.float32))
    ref_f32 = _reference(f_s, f_t, y_s, y_t, initial_T, temperature, jnp.float32)
    assert jnp.allclose(out_f32, ref_f32, rtol=1e-4, atol=1e-4), (out_f32, ref_f32)

    # Case 1b: default bf16 MXU operands (tolerance reflects bf16 operand rounding).
    out_bf16 = jax.block_until_ready(
        contrastive_distill_kl(f_s, f_t, y_s, y_t, initial_T, temperature,
                               matmul_dtype=jnp.bfloat16))
    ref_bf16 = _reference(f_s, f_t, y_s, y_t, initial_T, temperature, jnp.bfloat16)
    assert jnp.allclose(out_bf16, ref_bf16, rtol=5e-3, atol=5e-3), (out_bf16, ref_bf16)

    # Case 1c: classic online-softmax fallback (auto-selected for very small `temperature`).
    out_onl = jax.block_until_ready(
        contrastive_distill_kl(f_s, f_t, y_s, y_t, initial_T, temperature,
                               matmul_dtype=jnp.float32, use_fixed_shift=False))
    assert jnp.allclose(out_onl, ref_f32, rtol=1e-4, atol=1e-4), (out_onl, ref_f32)

    # Case 2: multi-tile 2x2 grid with padded rows/cols (B=200 -> blk=128, padded to 256).
    B2 = 200
    kk = jax.random.split(jax.random.PRNGKey(1), 4)
    f_s2 = jax.random.normal(kk[0], (B2, D), dtype=jnp.float32)
    f_t2 = jax.random.normal(kk[1], (B2, D), dtype=jnp.float32)
    y_s2 = jax.random.normal(kk[2], (B2, C), dtype=jnp.float32)
    y_t2 = jax.random.normal(kk[3], (B2, C), dtype=jnp.float32)
    out2 = jax.block_until_ready(
        contrastive_distill_kl(f_s2, f_t2, y_s2, y_t2, initial_T, temperature,
                               matmul_dtype=jnp.float32))
    ref2 = _reference(f_s2, f_t2, y_s2, y_t2, initial_T, temperature, jnp.float32)
    assert jnp.allclose(out2, ref2, rtol=1e-4, atol=1e-4), (out2, ref2)

    # Case 3: 1-D inputs (module's unsqueeze path, B=1 -> contrastive term == 0).
    kv = jax.random.split(jax.random.PRNGKey(2), 4)
    f_s3 = jax.random.normal(kv[0], (D,), dtype=jnp.float32)
    f_t3 = jax.random.normal(kv[1], (D,), dtype=jnp.float32)
    y_s3 = jax.random.normal(kv[2], (C,), dtype=jnp.float32)
    y_t3 = jax.random.normal(kv[3], (C,), dtype=jnp.float32)
    out3 = jax.block_until_ready(
        contrastive_distill_kl(f_s3, f_t3, y_s3, y_t3, initial_T, temperature,
                               matmul_dtype=jnp.float32))
    ref3 = _reference(f_s3, f_t3, y_s3, y_t3, initial_T, temperature, jnp.float32)
    assert jnp.allclose(out3, ref3, rtol=1e-4, atol=1e-4), (out3, ref3)

    print("KERNEL_OK")
</pallas_src>

<mosaic_0001>
module attributes {stable_mosaic.version = 11 : i64} {
  func.func @kernel(%arg0: i32, %arg1: i32, %arg2: memref<1xf32, #tpu.memory_space<smem>>, %arg3: memref<8x16xf32, #tpu.memory_space<vmem>>, %arg4: memref<8x16xf32, #tpu.memory_space<vmem>>, %arg5: memref<8x32xf32, #tpu.memory_space<vmem>>, %arg6: memref<32x8xf32, #tpu.memory_space<vmem>>, %arg7: memref<1x1x128xf32, #tpu.memory_space<vmem>>, %arg8: memref<1x1x128xf32, #tpu.memory_space<vmem>>, %arg9: memref<8x1xf32, #tpu.memory_space<vmem>>, %arg10: memref<8x1xf32, #tpu.memory_space<vmem>>, %arg11: memref<8x1xf32, #tpu.memory_space<vmem>>) attributes {dimension_semantics = [#tpu.dimension_semantics<parallel>, #tpu.dimension_semantics<arbitrary>], iteration_bounds = array<i64: 1, 1>, scalar_prefetch = 0 : i64, scratch_operands = 3 : i64, tpu.core_type = #tpu.core_type<tc>, window_params = [{transform_indices = @transform_0, window_bounds = array<i64: 1>}, {transform_indices = @transform_1, window_bounds = array<i64: 8, 16>}, {transform_indices = @transform_2, window_bounds = array<i64: 8, 16>}, {transform_indices = @transform_3, window_bounds = array<i64: 8, 32>}, {transform_indices = @transform_4, window_bounds = array<i64: 32, 8>}, {transform_indices = @transform_5, window_bounds = array<i64: 1, 1, 128>}, {transform_indices = @transform_6, window_bounds = array<i64: 1, 1, 128>}]} {
    %c0_i32 = arith.constant 0 : i32
    %0 = arith.cmpi eq, %arg1, %c0_i32 : i32
    %1 = arith.extui %0 : i1 to i32
    %c0_i32_0 = arith.constant 0 : i32
    %2 = arith.cmpi ne, %1, %c0_i32_0 : i32
    scf.if %2 {
      %cst_15 = arith.constant 0.000000e+00 : f32
      %30 = vector.broadcast %cst_15 : f32 to vector<8x1xf32>
      %c0_16 = arith.constant 0 : index
      %c0_17 = arith.constant 0 : index
      %31 = vector.load %arg9[%c0_16, %c0_17] : memref<8x1xf32, #tpu.memory_space<vmem>>, vector<8x1xf32>
      tpu.vector_store %arg9[%c0_16, %c0_17], %30 {strides = array<i32>} : memref<8x1xf32, #tpu.memory_space<vmem>>, vector<8x1xf32>,
    } else {
    }
    %c0 = arith.constant 0 : index
    %c0_1 = arith.constant 0 : index
    %3 = vector.load %arg5[%c0, %c0_1] : memref<8x32xf32, #tpu.memory_space<vmem>>, vector<8x32xf32>
    %c0_2 = arith.constant 0 : index
    %c0_3 = arith.constant 0 : index
    %4 = vector.load %arg6[%c0_2, %c0_3] : memref<32x8xf32, #tpu.memory_space<vmem>>, vector<32x8xf32>
    %cst = arith.constant dense<0.000000e+00> : vector<8x8xf32>
    %5 = tpu.matmul %3, %4, %cst {dimension_numbers = #tpu.dot_dimension_numbers<[1], [0], [0], [1], [0, 0, 1, 1], [], []>, precision = #tpu.contract_precision<fp32>} : vector<8x32xf32>, vector<32x8xf32>, vector<8x8xf32> -> vector<8x8xf32>
    %cst_4 = arith.constant 14.2857141 : f32
    %6 = vector.broadcast %cst_4 : f32 to vector<8x8xf32>
    %7 = arith.mulf %5, %6 : vector<8x8xf32>
    %8 = arith.cmpi eq, %arg1, %arg0 : i32
    %9 = arith.extui %8 : i1 to i32
    %c0_i32_5 = arith.constant 0 : i32
    %10 = arith.cmpi ne, %9, %c0_i32_5 : i32
    scf.if %10 {
      %30 = tpu.iota {dimensions = array<i32: 0>} : vector<8x8xi32>
      %31 = tpu.iota {dimensions = array<i32: 1>} : vector<8x8xi32>
      %32 = arith.cmpi eq, %30, %31 : vector<8x8xi32>
      %cst_15 = arith.constant 0.000000e+00 : f32
      %33 = vector.broadcast %cst_15 : f32 to vector<8x8xf32>
      %34 = arith.select %32, %7, %33 : vector<8x8xi1>, vector<8x8xf32>
      %cst_16 = arith.constant dense<0.000000e+00> : vector<8xf32>
      %35 = vector.multi_reduction <add>, %34, %cst_16 [1] : vector<8x8xf32> to vector<8xf32>
      %36 = vector.shape_cast %35 : vector<8xf32> to vector<8x1xf32>
      %c0_17 = arith.constant 0 : index
      %c0_18 = arith.constant 0 : index
      %37 = vector.load %arg10[%c0_17, %c0_18] : memref<8x1xf32, #tpu.memory_space<vmem>>, vector<8x1xf32>
      tpu.vector_store %arg10[%c0_17, %c0_18], %36 {strides = array<i32>} : memref<8x1xf32, #tpu.memory_space<vmem>>, vector<8x1xf32>,
    } else {
    }
    %c8_i32 = arith.constant 8 : i32
    %11 = arith.muli %arg1, %c8_i32 : i32
    %12 = tpu.iota {dimensions = array<i32: 1>} : vector<8x8xi32>
    %13 = vector.broadcast %11 : i32 to vector<8x8xi32>
    %14 = arith.addi %13, %12 : vector<8x8xi32>
    %c2_i32 = arith.constant 2 : i32
    %15 = vector.broadcast %c2_i32 : i32 to vector<8x8xi32>
    %16 = arith.cmpi slt, %14, %15 : vector<8x8xi32>
    %cst_6 = arith.constant -1.000000e+30 : f32
    %17 = vector.broadcast %cst_6 : f32 to vector<8x8xf32>
    %18 = arith.select %16, %7, %17 : vector<8x8xi1>, vector<8x8xf32>
    %c0_7 = arith.constant 0 : index
    %c0_8 = arith.constant 0 : index
    %19 = vector.load %arg9[%c0_7, %c0_8] : memref<8x1xf32, #tpu.memory_space<vmem>>, vector<8x1xf32>
    %cst_9 = arith.constant 14.2857141 : f32
    %20 = vector.broadcast %cst_9 : f32 to vector<8x8xf32>
    %21 = arith.subf %18, %20 : vector<8x8xf32>
    %22 = math.exp %21 : vector<8x8xf32>
    %cst_10 = arith.constant dense<0.000000e+00> : vector<8xf32>
    %23 = vector.multi_reduction <add>, %22, %cst_10 [1] : vector<8x8xf32> to vector<8xf32>
    %24 = vector.shape_cast %23 : vector<8xf32> to vector<8x1xf32>
    %25 = arith.addf %19, %24 : vector<8x1xf32>
    %c0_11 = arith.constant 0 : index
    %c0_12 = arith.constant 0 : index
    %26 = vector.load %arg9[%c0_11, %c0_12] : memref<8x1xf32, #tpu.memory_space<vmem>>, vector<8x1xf32>
    tpu.vector_store %arg9[%c0_11, %c0_12], %25 {strides = array<i32>} : memref<8x1xf32, #tpu.memory_space<vmem>>, vector<8x1xf32>,
    %c0_i32_13 = arith.constant 0 : i32
    %27 = arith.cmpi eq, %arg1, %c0_i32_13 : i32
    %28 = arith.extui %27 : i1 to i32
    %c0_i32_14 = arith.constant 0 : i32
    %29 = arith.cmpi ne, %28, %c0_i32_14 : i32
    scf.if %29 {
      %c0_15 = arith.constant 0 : index
      %c0_16 = arith.constant 0 : index
      %30 = vector.load %arg9[%c0_15, %c0_16] : memref<8x1xf32, #tpu.memory_space<vmem>>, vector<8x1xf32>
      %31 = math.log %30 : vector<8x1xf32>
      %cst_17 = arith.constant 14.2857141 : f32
      %32 = vector.broadcast %cst_17 : f32 to vector<8x1xf32>
      %33 = arith.addf %32, %31 : vector<8x1xf32>
      %c0_18 = arith.constant 0 : index
      %c0_19 = arith.constant 0 : index
      %34 = vector.load %arg10[%c0_18, %c0_19] : memref<8x1xf32, #tpu.memory_space<vmem>>, vector<8x1xf32>
      %35 = arith.subf %33, %34 : vector<8x1xf32>
      %c0_20 = arith.constant 0 : index
      %36 = memref.load %arg2[%c0_20] : memref<1xf32, #tpu.memory_space<smem>>
      %cst_21 = arith.constant 1.000000e+00 : f32
      %37 = arith.divf %cst_21, %36 : f32
      %c0_22 = arith.constant 0 : index
      %c0_23 = arith.constant 0 : index
      %38 = vector.load %arg3[%c0_22, %c0_23] : memref<8x16xf32, #tpu.memory_space<vmem>>, vector<8x16xf32>
      %39 = vector.broadcast %37 : f32 to vector<8x16xf32>
      %40 = arith.mulf %38, %39 : vector<8x16xf32>
      %c0_24 = arith.constant 0 : index
      %c0_25 = arith.constant 0 : index
      %41 = vector.load %arg4[%c0_24, %c0_25] : memref<8x16xf32, #tpu.memory_space<vmem>>, vector<8x16xf32>
      %42 = vector.broadcast %37 : f32 to vector<8x16xf32>
      %43 = arith.mulf %41, %42 : vector<8x16xf32>
      %cst_26 = arith.constant dense<0xFF800000> : vector<8xf32>
      %44 = vector.multi_reduction <maximumf>, %40, %cst_26 [1] : vector<8x16xf32> to vector<8xf32>
      %45 = vector.shape_cast %44 : vector<8xf32> to vector<8x1xf32>
      %46 = vector.broadcast %45 : vector<8x1xf32> to vector<8x16xf32>
      %47 = arith.subf %40, %46 : vector<8x16xf32>
      %48 = math.exp %47 : vector<8x16xf32>
      %cst_27 = arith.constant dense<0.000000e+00> : vector<8xf32>
      %49 = vector.multi_reduction <add>, %48, %cst_27 [1] : vector<8x16xf32> to vector<8xf32>
      %50 = vector.shape_cast %49 : vector<8xf32> to vector<8x1xf32>
      %51 = math.log %50 : vector<8x1xf32>
      %cst_28 = arith.constant dense<0xFF800000> : vector<8xf32>
      %52 = vector.multi_reduction <maximumf>, %43, %cst_28 [1] : vector<8x16xf32> to vector<8xf32>
      %53 = vector.shape_cast %52 : vector<8xf32> to vector<8x1xf32>
      %54 = vector.broadcast %53 : vector<8x1xf32> to vector<8x16xf32>
      %55 = arith.subf %43, %54 : vector<8x16xf32>
      %56 = math.exp %55 : vector<8x16xf32>
      %cst_29 = arith.constant dense<0.000000e+00> : vector<8xf32>
      %57 = vector.multi_reduction <add>, %56, %cst_29 [1] : vector<8x16xf32> to vector<8xf32>
      %58 = vector.shape_cast %57 : vector<8xf32> to vector<8x1xf32>
      %59 = math.log %58 : vector<8x1xf32>
      %60 = vector.broadcast %58 : vector<8x1xf32> to vector<8x16xf32>
      %61 = arith.divf %56, %60 : vector<8x16xf32>
      %62 = vector.broadcast %59 : vector<8x1xf32> to vector<8x16xf32>
      %63 = arith.subf %55, %62 : vector<8x16xf32>
      %64 = vector.broadcast %51 : vector<8x1xf32> to vector<8x16xf32>
      %65 = arith.subf %47, %64 : vector<8x16xf32>
      %66 = arith.subf %63, %65 : vector<8x16xf32>
      %67 = arith.mulf %61, %66 : vector<8x16xf32>
      %cst_30 = arith.constant dense<0.000000e+00> : vector<8xf32>
      %68 = vector.multi_reduction <add>, %67, %cst_30 [1] : vector<8x16xf32> to vector<8xf32>
      %69 = vector.shape_cast %68 : vector<8xf32> to vector<8x1xf32>
      %c8_i32_31 = arith.constant 8 : i32
      %70 = arith.muli %arg0, %c8_i32_31 : i32
      %71 = tpu.iota {dimensions = array<i32: 0>} : vector<8x1xi32>
      %72 = vector.broadcast %70 : i32 to vector<8x1xi32>
      %73 = arith.addi %72, %71 : vector<8x1xi32>
      %c2_i32_32 = arith.constant 2 : i32
      %74 = vector.broadcast %c2_i32_32 : i32 to vector<8x1xi32>
      %75 = arith.cmpi slt, %73, %74 : vector<8x1xi32>
      %cst_33 = arith.constant 0.000000e+00 : f32
      %76 = vector.broadcast %cst_33 : f32 to vector<8x1xf32>
      %77 = arith.select %75, %35, %76 : vector<8x1xi1>, vector<8x1xf32>
      %cst_34 = arith.constant 0.000000e+00 : f32
      %78 = vector.broadcast %cst_34 : f32 to vector<8x1xf32>
      %79 = arith.select %75, %69, %78 : vector<8x1xi1>, vector<8x1xf32>
      %80 = vector.shape_cast %79 : vector<8x1xf32> to vector<1x8x1xf32>
      %cst_35 = arith.constant dense<0.000000e+00> : vector<1xf32>
      %81 = vector.multi_reduction <add>, %80, %cst_35 [1, 2] : vector<1x8x1xf32> to vector<1xf32>
      %82 = vector.shape_cast %81 : vector<1xf32> to vector<1x1x1xf32>
      %83 = vector.extract %82[0, 0, 0] : f32 from vector<1x1x1xf32>
      %84 = vector.broadcast %83 : f32 to vector<1x1x128xf32>
      %c0_36 = arith.constant 0 : index
      %c0_37 = arith.constant 0 : index
      %c0_38 = arith.constant 0 : index
      %85 = vector.load %arg7[%c0_36, %c0_37, %c0_38] : memref<1x1x128xf32, #tpu.memory_space<vmem>>, vector<1x1x128xf32>
      tpu.vector_store %arg7[%c0_36, %c0_37, %c0_38], %84 {strides = array<i32>} : memref<1x1x128xf32, #tpu.memory_space<vmem>>, vector<1x1x128xf32>,
      %86 = vector.shape_cast %77 : vector<8x1xf32> to vector<1x8x1xf32>
      %cst_39 = arith.constant dense<0.000000e+00> : vector<1xf32>
      %87 = vector.multi_reduction <add>, %86, %cst_39 [1, 2] : vector<1x8x1xf32> to vector<1xf32>
      %88 = vector.shape_cast %87 : vector<1xf32> to vector<1x1x1xf32>
      %89 = vector.extract %88[0, 0, 0] : f32 from vector<1x1x1xf32>
      %90 = vector.broadcast %89 : f32 to vector<1x1x128xf32>
      %c0_40 = arith.constant 0 : index
      %c0_41 = arith.constant 0 : index
      %c0_42 = arith.constant 0 : index
      %91 = vector.load %arg8[%c0_40, %c0_41, %c0_42] : memref<1x1x128xf32, #tpu.memory_space<vmem>>, vector<1x1x128xf32>
      tpu.vector_store %arg8[%c0_40, %c0_41, %c0_42], %90 {strides = array<i32>} : memref<1x1x128xf32, #tpu.memory_space<vmem>>, vector<1x1x128xf32>,
    } else {
    }
    return
  }
  func.func @transform_0(%arg0: i32, %arg1: i32) -> i32 {
    %c0_i32 = arith.constant 0 : i32
    %c0_i32_0 = arith.constant 0 : i32
    return %c0_i32 : i32
  }
  func.func @transform_1(%arg0: i32, %arg1: i32) -> (i32, i32) {
    %c0_i32 = arith.constant 0 : i32
    %c0_i32_0 = arith.constant 0 : i32
    return %arg0, %c0_i32 : i32, i32
  }
  func.func @transform_2(%arg0: i32, %arg1: i32) -> (i32, i32) {
    %c0_i32 = arith.constant 0 : i32
    %c0_i32_0 = arith.constant 0 : i32
    return %arg0, %c0_i32 : i32, i32
  }
  func.func @transform_3(%arg0: i32, %arg1: i32) -> (i32, i32) {
    %c0_i32 = arith.constant 0 : i32
    %c0_i32_0 = arith.constant 0 : i32
    return %arg0, %c0_i32 : i32, i32
  }
  func.func @transform_4(%arg0: i32, %arg1: i32) -> (i32, i32) {
    %c0_i32 = arith.constant 0 : i32
    %c0_i32_0 = arith.constant 0 : i32
    return %c0_i32, %arg1 : i32, i32
  }
  func.func @transform_5(%arg0: i32, %arg1: i32) -> (i32, i32, i32) {
    %c0_i32 = arith.constant 0 : i32
    %c0_i32_0 = arith.constant 0 : i32
    %c0_i32_1 = arith.constant 0 : i32
    return %arg0, %c0_i32, %c0_i32_0 : i32, i32, i32
  }
  func.func @transform_6(%arg0: i32, %arg1: i32) -> (i32, i32, i32) {
    %c0_i32 = arith.constant 0 : i32
    %c0_i32_0 = arith.constant 0 : i32
    %c0_i32_1 = arith.constant 0 : i32
    return %arg0, %c0_i32, %c0_i32_0 : i32, i32, i32
  }
}

</mosaic_0001>

<llo_original>
// kernel: tpu_custom_call.1
$region0: #{tpu_custom_call.1}
  #allocation0 [shape = 'u32[]', space=smem, size = 0x4, offset = 0x4, fixed_abs, tag = 'smem constant byte address 0x4 - core index']
  #allocation1 [shape = 'u32[144,128]{1,0:T(1,128)}', space=vmem, size = 0x12000, scoped, tag = 'internal scratch']
  #allocation2 [shape = 'f32[8,1]{1,0:T(8,128)}', space=vmem, size = 0x1000, scoped, tag = 'scratch operand']
  #allocation3 [shape = 'f32[8,1]{1,0:T(8,128)}', space=vmem, size = 0x1000, scoped, tag = 'scratch operand']
  #allocation4 [shape = 'f32[8,1]{1,0:T(8,128)}', space=vmem, size = 0x1000, scoped, tag = 'scratch operand']
  #allocation5 [shape = 'f32[1]{0:T(128)S(6)}', space=smem, size = 0x200, scoped, tag = 'scoped memory for tpu_custom_call.1']
  %s0 = inlined_call_operand.<no memory space> [shape: f32[1], index: 0, kind: input, shape index: {}]
  %s1 = inlined_call_operand.vmem [shape: f32[8,16], index: 1, kind: input, shape index: {}]
  %s2 = inlined_call_operand.vmem [shape: f32[8,16], index: 2, kind: input, shape index: {}]
  %s3 = inlined_call_operand.vmem [shape: f32[8,32], index: 3, kind: input, shape index: {}]
  %s4 = inlined_call_operand.vmem [shape: f32[32,8], index: 4, kind: input, shape index: {}]
  %s5 = inlined_call_operand.hbm [shape: f32[1,1,128], index: 5, kind: output, shape index: {0}]
  %s6 = inlined_call_operand.hbm [shape: f32[1,1,128], index: 6, kind: output, shape index: {1}]
  %7 = xla_tuple %s5, %s6
  %s8 = sld [smem:[#allocation0]]
  $region50: #{tpu_custom_call.1} parent=0
    _
  %s10 = ssub.s32 1, %s8
  %s11 = scalar_select 0, %s10, %s8
  %12 = sst [smem:[#allocation5]] %s0
  $region1: #{tpu_custom_call.1} parent=0
    #allocation6 [shape = 'u8[512]{0}', space=vmem, size = 0x400, scoped, tag = 'output window, operand 0, single buffered']
    #allocation7 [shape = 's32[1]{0}', space=sflag, size = 0x4, scoped, tag = 'scoped memory for tpu_custom_call.1']
    #allocation8 [shape = 'u8[512]{0}', space=vmem, size = 0x400, scoped, tag = 'output window, operand 1, single buffered']
    #allocation9 [shape = 's32[1]{0}', space=sflag, size = 0x4, scoped, tag = 'scoped memory for tpu_custom_call.1']
    %13 = vsyncpa [#allocation7], 0
    %14 = vsyncpa [#allocation9], 0
    // Predicated region
    $region2: #{tpu_custom_call.1} parent=1 // pred_check
      _
    $region3: #{tpu_custom_call.1} parent=1 // pred_check_branch
      %16 = sbr.rel (0) target = $region5
    $region4: #{tpu_custom_call.1} parent=1 // pred_region
      _
    $region5: #{tpu_custom_call.1} parent=1 // pred_fallthru
      _
    // Predicated region
    $region6: #{tpu_custom_call.1} parent=1 // pred_check
      _
    $region7: #{tpu_custom_call.1} parent=1 // pred_check_branch
      %18 = sbr.rel (0) target = $region9
    $region8: #{tpu_custom_call.1} parent=1 // pred_region
      _
    $region9: #{tpu_custom_call.1} parent=1 // pred_fallthru
      _
    // Predicated region
    $region10: #{tpu_custom_call.1} parent=1 // pred_check
      _
    $region11: #{tpu_custom_call.1} parent=1 // pred_check_branch
      %20 = sbr.rel (0) target = $region13
    $region12: #{tpu_custom_call.1} parent=1 // pred_region
      _
    $region13: #{tpu_custom_call.1} parent=1 // pred_fallthru
      _
    // Predicated region
    $region14: #{tpu_custom_call.1} parent=1 // pred_check
      _
    $region15: #{tpu_custom_call.1} parent=1 // pred_check_branch
      %22 = sbr.rel (0) target = $region17
    $region16: #{tpu_custom_call.1} parent=1 // pred_region
      _
    $region17: #{tpu_custom_call.1} parent=1 // pred_fallthru
      _
    // Predicated region
    $region18: #{tpu_custom_call.1} parent=1 // pred_check
      _
    $region19: #{tpu_custom_call.1} parent=1 // pred_check_branch
      %24 = sbr.rel (0) target = $region21
    $region20: #{tpu_custom_call.1} parent=1 // pred_region
      _
    $region21: #{tpu_custom_call.1} parent=1 // pred_fallthru
      _
    %p25 = scmp.eq.s32.totalorder 0, 0
    // Predicated region
    $region22: #{tpu_custom_call.1} parent=1 // pred_check
      %p26 = pneg %p25
    $region23: #{tpu_custom_call.1} parent=1 // pred_check_branch
      %28 = sbr.rel (%p26) target = $region25
    $region24: #{tpu_custom_call.1} parent=1 // pred_region
      %vm29 = vcmask 7168
      %30 = vst.msk [vmem:[#allocation2] sm:$0xff] %vm29, 0.0
    $region25: #{tpu_custom_call.1} parent=1 // pred_fallthru
      _
    %v31 = vld [vmem:[%s3] sm:$0xff]
    %v32 = vld [vmem:[%s4] sm:$0xff]
    %v33 = vld [vmem:[%s4 + $0x8] sm:$0xff]
    %v34 = vld [vmem:[%s4 + $0x10] sm:$0xff]
    %v35 = vld [vmem:[%s4 + $0x18] sm:$0xff]
    %vm36 = vcmask 261120
    %v38 = vsel %vm36, %v31, 0
    %40 = vmatprep.subr.mxu0 0.0
    %41 = vmatpush1.msra.mxu0 0.0
    %42 = vmatprep.subr.mxu0 0.0
    %43 = vmatpush1.msra.mxu0 0.0
    %44 = vmatprep.subr.mxu0 0.0
    %45 = vmatpush1.msra.mxu0 0.0
    %46 = vmatprep.subr.mxu0 0.0
    %47 = vmatpush1.msra.mxu0 0.0
    %48 = vmatprep.subr.mxu0 0.0
    %49 = vmatpush1.msra.mxu0 0.0
    %50 = vmatprep.subr.mxu0 0.0
    %51 = vmatpush1.msra.mxu0 0.0
    %52 = vmatprep.subr.mxu0 0.0
    %53 = vmatpush1.msra.mxu0 0.0
    %54 = vmatprep.subr.mxu0 0.0
    %55 = vmatpush1.msra.mxu0 0.0
    %56 = vmatprep.subr.mxu0 0.0
    %57 = vmatpush1.msra.mxu0 0.0
    %58 = vmatprep.subr.mxu0 0.0
    %59 = vmatpush1.msra.mxu0 0.0
    %60 = vmatprep.subr.mxu0 0.0
    %61 = vmatpush1.msra.mxu0 0.0
    %62 = vmatprep.subr.mxu0 0.0
    %63 = vmatpush1.msra.mxu0 0.0
    %64 = vmatprep.subr.mxu0 0.0
    %v65 = vand.u32 %v35, 4294901760
    %66 = vmatpush1.msra.mxu0 %v65
    %67 = vmatprep.subr.mxu0 0.0
    %v68 = vand.u32 %v34, 4294901760
    %69 = vmatpush1.msra.mxu0 %v68
    %70 = vmatprep.subr.mxu0 0.0
    %v71 = vand.u32 %v33, 4294901760
    %72 = vmatpush1.msra.mxu0 %v71
    %73 = vmatprep.subr.mxu0 0.0
    %v74 = vand.u32 %v32, 4294901760
    %75 = vmatpush1.msra.mxu0 %v74
    %76 = vmatprep.subr.mxu0 0.0
    %77 = vmatpush2.msra.mxu0 0.0
    %78 = vmatprep.subr.mxu0 0.0
    %79 = vmatpush2.msra.mxu0 0.0
    %80 = vmatprep.subr.mxu0 0.0
    %81 = vmatpush2.msra.mxu0 0.0
    %82 = vmatprep.subr.mxu0 0.0
    %83 = vmatpush2.msra.mxu0 0.0
    %84 = vmatprep.subr.mxu0 0.0
    %85 = vmatpush2.msra.mxu0 0.0
    %86 = vmatprep.subr.mxu0 0.0
    %87 = vmatpush2.msra.mxu0 0.0
    %88 = vmatprep.subr.mxu0 0.0
    %89 = vmatpush2.msra.mxu0 0.0
    %90 = vmatprep.subr.mxu0 0.0
    %91 = vmatpush2.msra.mxu0 0.0
    %92 = vmatprep.subr.mxu0 0.0
    %93 = vmatpush2.msra.mxu0 0.0
    %94 = vmatprep.subr.mxu0 0.0
    %95 = vmatpush2.msra.mxu0 0.0
    %96 = vmatprep.subr.mxu0 0.0
    %97 = vmatpush2.msra.mxu0 0.0
    %98 = vmatprep.subr.mxu0 0.0
    %99 = vmatpush2.msra.mxu0 0.0
    %100 = vmatprep.subr.mxu0 0.0
    %101 = vmatpush2.msra.mxu0 0.0
    %102 = vmatprep.subr.mxu0 0.0
    %103 = vmatpush2.msra.mxu0 0.0
    %104 = vmatprep.subr.mxu0 0.0
    %105 = vmatpush2.msra.mxu0 0.0
    %106 = vmatprep.subr.mxu0 0.0
    %107 = vmatpush2.msra.mxu0 0.0
    %108 = vmatprep.mubr.f32.mxu0 0.0
    %v109 = vand.u32 %v38, 4294901760
    %v110 = vsub.f32 %v38, %v109
    %v111 = vand.u32 %v110, 4294901760
    %v112 = vsub.f32 %v110, %v111
    %v113 = vand.u32 %v112, 4294901760
    %114 = vmatmul.mubr.f32.gmra.mxu0 %v113
    %v115 = vpop.f32.mrf.mxu0
    %v116 = vadd.f32 0.0, %v115
    %v117 = vpop.f32.mrf.mxu0
    %118 = vdwg.mxu0
    %119 = vmatprep.subr.mxu0 0.0
    %120 = vmatpush1.msra.mxu0 0.0
    %121 = vmatprep.subr.mxu0 0.0
    %122 = vmatpush1.msra.mxu0 0.0
    %123 = vmatprep.subr.mxu0 0.0
    %124 = vmatpush1.msra.mxu0 0.0
    %125 = vmatprep.subr.mxu0 0.0
    %126 = vmatpush1.msra.mxu0 0.0
    %127 = vmatprep.subr.mxu0 0.0
    %128 = vmatpush1.msra.mxu0 0.0
    %129 = vmatprep.subr.mxu0 0.0
    %130 = vmatpush1.msra.mxu0 0.0
    %131 = vmatprep.subr.mxu0 0.0
    %132 = vmatpush1.msra.mxu0 0.0
    %133 = vmatprep.subr.mxu0 0.0
    %134 = vmatpush1.msra.mxu0 0.0
    %135 = vmatprep.subr.mxu0 0.0
    %136 = vmatpush1.msra.mxu0 0.0
    %137 = vmatprep.subr.mxu0 0.0
    %138 = vmatpush1.msra.mxu0 0.0
    %139 = vmatprep.subr.mxu0 0.0
    %140 = vmatpush1.msra.mxu0 0.0
    %141 = vmatprep.subr.mxu0 0.0
    %142 = vmatpush1.msra.mxu0 0.0
    %143 = vmatprep.subr.mxu0 0.0
    %v144 = vand.u32 %v35, 4294901760
    %v145 = vsub.f32 %v35, %v144
    %v146 = vand.u32 %v145, 4294901760
    %v147 = vsub.f32 %v145, %v146
    %v148 = vand.u32 %v147, 4294901760
    %149 = vmatpush1.msra.mxu0 %v148
    %150 = vmatprep.subr.mxu0 0.0
    %v151 = vand.u32 %v34, 4294901760
    %v152 = vsub.f32 %v34, %v151
    %v153 = vand.u32 %v152, 4294901760
    %v154 = vsub.f32 %v152, %v153
    %v155 = vand.u32 %v154, 4294901760
    %156 = vmatpush1.msra.mxu0 %v155
    %157 = vmatprep.subr.mxu0 0.0
    %v158 = vand.u32 %v33, 4294901760
    %v159 = vsub.f32 %v33, %v158
    %v160 = vand.u32 %v159, 4294901760
    %v161 = vsub.f32 %v159, %v160
    %v162 = vand.u32 %v161, 4294901760
    %163 = vmatpush1.msra.mxu0 %v162
    %164 = vmatprep.subr.mxu0 0.0
    %v165 = vand.u32 %v32, 4294901760
    %v166 = vsub.f32 %v32, %v165
    %v167 = vand.u32 %v166, 4294901760
    %v168 = vsub.f32 %v166, %v167
    %v169 = vand.u32 %v168, 4294901760
    %170 = vmatpush1.msra.mxu0 %v169
    %171 = vmatprep.subr.mxu0 0.0
    %172 = vmatpush2.msra.mxu0 0.0
    %173 = vmatprep.subr.mxu0 0.0
    %174 = vmatpush2.msra.mxu0 0.0
    %175 = vmatprep.subr.mxu0 0.0
    %176 = vmatpush2.msra.mxu0 0.0
    %177 = vmatprep.subr.mxu0 0.0
    %178 = vmatpush2.msra.mxu0 0.0
    %179 = vmatprep.subr.mxu0 0.0
    %180 = vmatpush2.msra.mxu0 0.0
    %181 = vmatprep.subr.mxu0 0.0
    %182 = vmatpush2.msra.mxu0 0.0
    %183 = vmatprep.subr.mxu0 0.0
    %184 = vmatpush2.msra.mxu0 0.0
    %185 = vmatprep.subr.mxu0 0.0
    %186 = vmatpush2.msra.mxu0 0.0
    %187 = vmatprep.subr.mxu0 0.0
    %188 = vmatpush2.msra.mxu0 0.0
    %189 = vmatprep.subr.mxu0 0.0
    %190 = vmatpush2.msra.mxu0 0.0
    %191 = vmatprep.subr.mxu0 0.0
    %192 = vmatpush2.msra.mxu0 0.0
    %193 = vmatprep.subr.mxu0 0.0
    %194 = vmatpush2.msra.mxu0 0.0
    %195 = vmatprep.subr.mxu0 0.0
    %196 = vmatpush2.msra.mxu0 0.0
    %197 = vmatprep.subr.mxu0 0.0
    %198 = vmatpush2.msra.mxu0 0.0
    %199 = vmatprep.subr.mxu0 0.0
    %200 = vmatpush2.msra.mxu0 0.0
    %201 = vmatprep.subr.mxu0 0.0
    %202 = vmatpush2.msra.mxu0 0.0
    %203 = vmatprep.mubr.f32.mxu0 0.0
    %v204 = vand.u32 %v38, 4294901760
    %205 = vmatmul.mubr.f32.gmra.mxu0 %v204
    %v206 = vpop.f32.mrf.mxu0
    %v207 = vadd.f32 %v116, %v206
    %v208 = vpop.f32.mrf.mxu0
    %209 = vdwg.mxu0
    %210 = vmatprep.subr.mxu0 0.0
    %211 = vmatpush1.msra.mxu0 0.0
    %212 = vmatprep.subr.mxu0 0.0
    %213 = vmatpush1.msra.mxu0 0.0
    %214 = vmatprep.subr.mxu0 0.0
    %215 = vmatpush1.msra.mxu0 0.0
    %216 = vmatprep.subr.mxu0 0.0
    %217 = vmatpush1.msra.mxu0 0.0
    %218 = vmatprep.subr.mxu0 0.0
    %219 = vmatpush1.msra.mxu0 0.0
    %220 = vmatprep.subr.mxu0 0.0
    %221 = vmatpush1.msra.mxu0 0.0
    %222 = vmatprep.subr.mxu0 0.0
    %223 = vmatpush1.msra.mxu0 0.0
    %224 = vmatprep.subr.mxu0 0.0
    %225 = vmatpush1.msra.mxu0 0.0
    %226 = vmatprep.subr.mxu0 0.0
    %227 = vmatpush1.msra.mxu0 0.0
    %228 = vmatprep.subr.mxu0 0.0
    %229 = vmatpush1.msra.mxu0 0.0
    %230 = vmatprep.subr.mxu0 0.0
    %231 = vmatpush1.msra.mxu0 0.0
    %232 = vmatprep.subr.mxu0 0.0
    %233 = vmatpush1.msra.mxu0 0.0
    %234 = vmatprep.subr.mxu0 0.0
    %v235 = vand.u32 %v35, 4294901760
    %v236 = vsub.f32 %v35, %v235
    %237 = vmatpush1.msra.mxu0 %v236
    %238 = vmatprep.subr.mxu0 0.0
    %v239 = vand.u32 %v34, 4294901760
    %v240 = vsub.f32 %v34, %v239
    %241 = vmatpush1.msra.mxu0 %v240
    %242 = vmatprep.subr.mxu0 0.0
    %v243 = vand.u32 %v33, 4294901760
    %v244 = vsub.f32 %v33, %v243
    %245 = vmatpush1.msra.mxu0 %v244
    %246 = vmatprep.subr.mxu0 0.0
    %v247 = vand.u32 %v32, 4294901760
    %v248 = vsub.f32 %v32, %v247
    %249 = vmatpush1.msra.mxu0 %v248
    %250 = vmatprep.subr.mxu0 0.0
    %251 = vmatpush2.msra.mxu0 0.0
    %252 = vmatprep.subr.mxu0 0.0
    %253 = vmatpush2.msra.mxu0 0.0
    %254 = vmatprep.subr.mxu0 0.0
    %255 = vmatpush2.msra.mxu0 0.0
    %256 = vmatprep.subr.mxu0 0.0
    %257 = vmatpush2.msra.mxu0 0.0
    %258 = vmatprep.subr.mxu0 0.0
    %259 = vmatpush2.msra.mxu0 0.0
    %260 = vmatprep.subr.mxu0 0.0
    %261 = vmatpush2.msra.mxu0 0.0
    %262 = vmatprep.subr.mxu0 0.0
    %263 = vmatpush2.msra.mxu0 0.0
    %264 = vmatprep.subr.mxu0 0.0
    %265 = vmatpush2.msra.mxu0 0.0
    %266 = vmatprep.subr.mxu0 0.0
    %267 = vmatpush2.msra.mxu0 0.0
    %268 = vmatprep.subr.mxu0 0.0
    %269 = vmatpush2.msra.mxu0 0.0
    %270 = vmatprep.subr.mxu0 0.0
    %271 = vmatpush2.msra.mxu0 0.0
    %272 = vmatprep.subr.mxu0 0.0
    %273 = vmatpush2.msra.mxu0 0.0
    %274 = vmatprep.subr.mxu0 0.0
    %275 = vmatpush2.msra.mxu0 0.0
    %276 = vmatprep.subr.mxu0 0.0
    %277 = vmatpush2.msra.mxu0 0.0
    %278 = vmatprep.subr.mxu0 0.0
    %279 = vmatpush2.msra.mxu0 0.0
    %280 = vmatprep.subr.mxu0 0.0
    %281 = vmatpush2.msra.mxu0 0.0
    %282 = vmatprep.mubr.f32.mxu0 0.0
    %v283 = vand.u32 %v38, 4294901760
    %v284 = vsub.f32 %v38, %v283
    %285 = vmatmul.mubr.f32.gmra.mxu0 %v284
    %v286 = vpop.f32.mrf.mxu0
    %v287 = vadd.f32 %v207, %v286
    %v288 = vpop.f32.mrf.mxu0
    %289 = vdwg.mxu0
    %290 = vmatprep.subr.mxu0 0.0
    %291 = vmatpush1.msra.mxu0 0.0
    %292 = vmatprep.subr.mxu0 0.0
    %293 = vmatpush1.msra.mxu0 0.0
    %294 = vmatprep.subr.mxu0 0.0
    %295 = vmatpush1.msra.mxu0 0.0
    %296 = vmatprep.subr.mxu0 0.0
    %297 = vmatpush1.msra.mxu0 0.0
    %298 = vmatprep.subr.mxu0 0.0
    %299 = vmatpush1.msra.mxu0 0.0
    %300 = vmatprep.subr.mxu0 0.0
    %301 = vmatpush1.msra.mxu0 0.0
    %302 = vmatprep.subr.mxu0 0.0
    %303 = vmatpush1.msra.mxu0 0.0
    %304 = vmatprep.subr.mxu0 0.0
    %305 = vmatpush1.msra.mxu0 0.0
    %306 = vmatprep.subr.mxu0 0.0
    %307 = vmatpush1.msra.mxu0 0.0
    %308 = vmatprep.subr.mxu0 0.0
    %309 = vmatpush1.msra.mxu0 0.0
    %310 = vmatprep.subr.mxu0 0.0
    %311 = vmatpush1.msra.mxu0 0.0
    %312 = vmatprep.subr.mxu0 0.0
    %313 = vmatpush1.msra.mxu0 0.0
    %314 = vmatprep.subr.mxu0 0.0
    %v315 = vand.u32 %v35, 4294901760
    %316 = vmatpush1.msra.mxu0 %v315
    %317 = vmatprep.subr.mxu0 0.0
    %v318 = vand.u32 %v34, 4294901760
    %319 = vmatpush1.msra.mxu0 %v318
    %320 = vmatprep.subr.mxu0 0.0
    %v321 = vand.u32 %v33, 4294901760
    %322 = vmatpush1.msra.mxu0 %v321
    %323 = vmatprep.subr.mxu0 0.0
    %v324 = vand.u32 %v32, 4294901760
    %325 = vmatpush1.msra.mxu0 %v324
    %326 = vmatprep.subr.mxu0 0.0
    %327 = vmatpush2.msra.mxu0 0.0
    %328 = vmatprep.subr.mxu0 0.0
    %329 = vmatpush2.msra.mxu0 0.0
    %330 = vmatprep.subr.mxu0 0.0
    %331 = vmatpush2.msra.mxu0 0.0
    %332 = vmatprep.subr.mxu0 0.0
    %333 = vmatpush2.msra.mxu0 0.0
    %334 = vmatprep.subr.mxu0 0.0
    %335 = vmatpush2.msra.mxu0 0.0
    %336 = vmatprep.subr.mxu0 0.0
    %337 = vmatpush2.msra.mxu0 0.0
    %338 = vmatprep.subr.mxu0 0.0
    %339 = vmatpush2.msra.mxu0 0.0
    %340 = vmatprep.subr.mxu0 0.0
    %341 = vmatpush2.msra.mxu0 0.0
    %342 = vmatprep.subr.mxu0 0.0
    %343 = vmatpush2.msra.mxu0 0.0
    %344 = vmatprep.subr.mxu0 0.0
    %345 = vmatpush2.msra.mxu0 0.0
    %346 = vmatprep.subr.mxu0 0.0
    %347 = vmatpush2.msra.mxu0 0.0
    %348 = vmatprep.subr.mxu0 0.0
    %349 = vmatpush2.msra.mxu0 0.0
    %350 = vmatprep.subr.mxu0 0.0
    %351 = vmatpush2.msra.mxu0 0.0
    %352 = vmatprep.subr.mxu0 0.0
    %353 = vmatpush2.msra.mxu0 0.0
    %354 = vmatprep.subr.mxu0 0.0
    %355 = vmatpush2.msra.mxu0 0.0
    %356 = vmatprep.subr.mxu0 0.0
    %357 = vmatpush2.msra.mxu0 0.0
    %358 = vmatprep.mubr.f32.mxu0 0.0
    %v359 = vand.u32 %v38, 4294901760
    %v360 = vsub.f32 %v38, %v359
    %v361 = vand.u32 %v360, 4294901760
    %362 = vmatmul.mubr.f32.gmra.mxu0 %v361
    %v363 = vpop.f32.mrf.mxu0
    %v364 = vadd.f32 %v287, %v363
    %v365 = vpop.f32.mrf.mxu0
    %366 = vdwg.mxu0
    %367 = vmatprep.subr.mxu0 0.0
    %368 = vmatpush1.msra.mxu0 0.0
    %369 = vmatprep.subr.mxu0 0.0
    %370 = vmatpush1.msra.mxu0 0.0
    %371 = vmatprep.subr.mxu0 0.0
    %372 = vmatpush1.msra.mxu0 0.0
    %373 = vmatprep.subr.mxu0 0.0
    %374 = vmatpush1.msra.mxu0 0.0
    %375 = vmatprep.subr.mxu0 0.0
    %376 = vmatpush1.msra.mxu0 0.0
    %377 = vmatprep.subr.mxu0 0.0
    %378 = vmatpush1.msra.mxu0 0.0
    %379 = vmatprep.subr.mxu0 0.0
    %380 = vmatpush1.msra.mxu0 0.0
    %381 = vmatprep.subr.mxu0 0.0
    %382 = vmatpush1.msra.mxu0 0.0
    %383 = vmatprep.subr.mxu0 0.0
    %384 = vmatpush1.msra.mxu0 0.0
    %385 = vmatprep.subr.mxu0 0.0
    %386 = vmatpush1.msra.mxu0 0.0
    %387 = vmatprep.subr.mxu0 0.0
    %388 = vmatpush1.msra.mxu0 0.0
    %389 = vmatprep.subr.mxu0 0.0
    %390 = vmatpush1.msra.mxu0 0.0
    %391 = vmatprep.subr.mxu0 0.0
    %v392 = vand.u32 %v35, 4294901760
    %v393 = vsub.f32 %v35, %v392
    %v394 = vand.u32 %v393, 4294901760
    %395 = vmatpush1.msra.mxu0 %v394
    %396 = vmatprep.subr.mxu0 0.0
    %v397 = vand.u32 %v34, 4294901760
    %v398 = vsub.f32 %v34, %v397
    %v399 = vand.u32 %v398, 4294901760
    %400 = vmatpush1.msra.mxu0 %v399
    %401 = vmatprep.subr.mxu0 0.0
    %v402 = vand.u32 %v33, 4294901760
    %v403 = vsub.f32 %v33, %v402
    %v404 = vand.u32 %v403, 4294901760
    %405 = vmatpush1.msra.mxu0 %v404
    %406 = vmatprep.subr.mxu0 0.0
    %v407 = vand.u32 %v32, 4294901760
    %v408 = vsub.f32 %v32, %v407
    %v409 = vand.u32 %v408, 4294901760
    %410 = vmatpush1.msra.mxu0 %v409
    %411 = vmatprep.subr.mxu0 0.0
    %412 = vmatpush2.msra.mxu0 0.0
    %413 = vmatprep.subr.mxu0 0.0
    %414 = vmatpush2.msra.mxu0 0.0
    %415 = vmatprep.subr.mxu0 0.0
    %416 = vmatpush2.msra.mxu0 0.0
    %417 = vmatprep.subr.mxu0 0.0
    %418 = vmatpush2.msra.mxu0 0.0
    %419 = vmatprep.subr.mxu0 0.0
    %420 = vmatpush2.msra.mxu0 0.0
    %421 = vmatprep.subr.mxu0 0.0
    %422 = vmatpush2.msra.mxu0 0.0
    %423 = vmatprep.subr.mxu0 0.0
    %424 = vmatpush2.msra.mxu0 0.0
    %425 = vmatprep.subr.mxu0 0.0
    %426 = vmatpush2.msra.mxu0 0.0
    %427 = vmatprep.subr.mxu0 0.0
    %428 = vmatpush2.msra.mxu0 0.0
    %429 = vmatprep.subr.mxu0 0.0
    %430 = vmatpush2.msra.mxu0 0.0
    %431 = vmatprep.subr.mxu0 0.0
    %432 = vmatpush2.msra.mxu0 0.0
    %433 = vmatprep.subr.mxu0 0.0
    %434 = vmatpush2.msra.mxu0 0.0
    %435 = vmatprep.subr.mxu0 0.0
    %436 = vmatpush2.msra.mxu0 0.0
    %437 = vmatprep.subr.mxu0 0.0
    %438 = vmatpush2.msra.mxu0 0.0
    %439 = vmatprep.subr.mxu0 0.0
    %440 = vmatpush2.msra.mxu0 0.0
    %441 = vmatprep.subr.mxu0 0.0
    %442 = vmatpush2.msra.mxu0 0.0
    %443 = vmatprep.mubr.f32.mxu0 0.0
    %v444 = vand.u32 %v38, 4294901760
    %445 = vmatmul.mubr.f32.gmra.mxu0 %v444
    %v446 = vpop.f32.mrf.mxu0
    %v447 = vadd.f32 %v364, %v446
    %v448 = vpop.f32.mrf.mxu0
    %449 = vdwg.mxu0
    %450 = vmatprep.subr.mxu0 0.0
    %451 = vmatpush1.msra.mxu0 0.0
    %452 = vmatprep.subr.mxu0 0.0
    %453 = vmatpush1.msra.mxu0 0.0
    %454 = vmatprep.subr.mxu0 0.0
    %455 = vmatpush1.msra.mxu0 0.0
    %456 = vmatprep.subr.mxu0 0.0
    %457 = vmatpush1.msra.mxu0 0.0
    %458 = vmatprep.subr.mxu0 0.0
    %459 = vmatpush1.msra.mxu0 0.0
    %460 = vmatprep.subr.mxu0 0.0
    %461 = vmatpush1.msra.mxu0 0.0
    %462 = vmatprep.subr.mxu0 0.0
    %463 = vmatpush1.msra.mxu0 0.0
    %464 = vmatprep.subr.mxu0 0.0
    %465 = vmatpush1.msra.mxu0 0.0
    %466 = vmatprep.subr.mxu0 0.0
    %467 = vmatpush1.msra.mxu0 0.0
    %468 = vmatprep.subr.mxu0 0.0
    %469 = vmatpush1.msra.mxu0 0.0
    %470 = vmatprep.subr.mxu0 0.0
    %471 = vmatpush1.msra.mxu0 0.0
    %472 = vmatprep.subr.mxu0 0.0
    %473 = vmatpush1.msra.mxu0 0.0
    %474 = vmatprep.subr.mxu0 0.0
    %v475 = vand.u32 %v35, 4294901760
    %476 = vmatpush1.msra.mxu0 %v475
    %477 = vmatprep.subr.mxu0 0.0
    %v478 = vand.u32 %v34, 4294901760
    %479 = vmatpush1.msra.mxu0 %v478
    %480 = vmatprep.subr.mxu0 0.0
    %v481 = vand.u32 %v33, 4294901760
    %482 = vmatpush1.msra.mxu0 %v481
    %483 = vmatprep.subr.mxu0 0.0
    %v484 = vand.u32 %v32, 4294901760
    %485 = vmatpush1.msra.mxu0 %v484
    %486 = vmatprep.subr.mxu0 0.0
    %487 = vmatpush2.msra.mxu0 0.0
    %488 = vmatprep.subr.mxu0 0.0
    %489 = vmatpush2.msra.mxu0 0.0
    %490 = vmatprep.subr.mxu0 0.0
    %491 = vmatpush2.msra.mxu0 0.0
    %492 = vmatprep.subr.mxu0 0.0
    %493 = vmatpush2.msra.mxu0 0.0
    %494 = vmatprep.subr.mxu0 0.0
    %495 = vmatpush2.msra.mxu0 0.0
    %496 = vmatprep.subr.mxu0 0.0
    %497 = vmatpush2.msra.mxu0 0.0
    %498 = vmatprep.subr.mxu0 0.0
    %499 = vmatpush2.msra.mxu0 0.0
    %500 = vmatprep.subr.mxu0 0.0
    %501 = vmatpush2.msra.mxu0 0.0
    %502 = vmatprep.subr.mxu0 0.0
    %503 = vmatpush2.msra.mxu0 0.0
    %504 = vmatprep.subr.mxu0 0.0
    %505 = vmatpush2.msra.mxu0 0.0
    %506 = vmatprep.subr.mxu0 0.0
    %507 = vmatpush2.msra.mxu0 0.0
    %508 = vmatprep.subr.mxu0 0.0
    %509 = vmatpush2.msra.mxu0 0.0
    %510 = vmatprep.subr.mxu0 0.0
    %511 = vmatpush2.msra.mxu0 0.0
    %512 = vmatprep.subr.mxu0 0.0
    %513 = vmatpush2.msra.mxu0 0.0
    %514 = vmatprep.subr.mxu0 0.0
    %515 = vmatpush2.msra.mxu0 0.0
    %516 = vmatprep.subr.mxu0 0.0
    %517 = vmatpush2.msra.mxu0 0.0
    %518 = vmatprep.mubr.f32.mxu0 0.0
    %v519 = vand.u32 %v38, 4294901760
    %520 = vmatmul.mubr.f32.gmra.mxu0 %v519
    %v521 = vpop.f32.mrf.mxu0
    %v522 = vadd.f32 %v447, %v521
    %v523 = vpop.f32.mrf.mxu0
    %524 = vdwg.mxu0
    %v525 = vmul.f32 %v522, 14.285714
    %p526 = scmp.eq.s32.totalorder 0, 0
    // Predicated region
    $region26: #{tpu_custom_call.1} parent=1 // pred_check
      %p527 = pneg %p526
    $region27: #{tpu_custom_call.1} parent=1 // pred_check_branch
      %529 = sbr.rel (%p527) target = $region29
    $region28: #{tpu_custom_call.1} parent=1 // pred_region
      %v530 = vlaneseq
      %v531 = vshrl.u32 %v530, 7
      %v532 = vlaneseq
      %v533 = vand.u32 %v532, 127
      %vm534 = vcmp.eq.s32.totalorder %v531, %v533
      %v535 = vsel %vm534, %v525, 0.0
      %vm536 = vcmask 64512
      %v537 = vsel %vm536, %v535, 0.0
      %538 = vadd.xlane.f32.xlu0 %v537
      %v539 = vpop.xlane.xlu0 %538
      %vm540 = vcmask 7168
      %541 = vst.msk [vmem:[#allocation3] sm:$0xff] %vm540, %v539
    $region29: #{tpu_custom_call.1} parent=1 // pred_fallthru
      _
    %s542 = smul.u32 0, 8
    %v543 = vlaneseq
    %v544 = vand.u32 %v543, 127
    %v545 = vstv %s542
    %v546 = vadd.s32 %v545, %v544
    %vm547 = vcmp.lt.s32.totalorder %v546, 2
    %v548 = vsel %vm547, %v525, -1e+30
    %v549 = vld [vmem:[#allocation2] sm:$0xff]
    %v550 = vsub.f32 %v548, 14.285714
    %v551 = vmul.f32 %v550, 1.442695
    %v552 = vpow.pop %v551
    %vm553 = vcmask 64512
    %v554 = vsel %vm553, %v552, 0.0
    %555 = vadd.xlane.f32.xlu0 %v554
    %v556 = vpop.xlane.xlu0 %555
    %v557 = vadd.f32 %v549, %v556
    %vm558 = vcmask 7168
    %559 = vst.msk [vmem:[#allocation2] sm:$0xff] %vm558, %v557
    // Predicated region
    $region30: #{tpu_custom_call.1} parent=1 // pred_check
      %p560 = pneg %p25
    $region31: #{tpu_custom_call.1} parent=1 // pred_check_branch
      %562 = sbr.rel (%p560) target = $region33
    $region32: #{tpu_custom_call.1} parent=1 // pred_region
      %v563 = vld [vmem:[#allocation2] sm:$0xff]
      %v564 = vlog2.pop %v563
      %v565 = vmul.f32 %v564, 0.6931472
      %v566 = vadd.f32 %v565, 14.285714
      %v567 = vld [vmem:[#allocation3] sm:$0xff]
      %v568 = vsub.f32 %v566, %v567
      %s569 = sld [smem:[#allocation5]]
      %v570 = vstv %s569
      %v571 = vrcp.pop %v570
      %s572 = vtos %v571
      %v573 = vld [vmem:[%s1] sm:$0xff]
      %v574 = vstv %s572
      %v575 = vmul.f32 %v573, %v574
      %v576 = vld [vmem:[%s2] sm:$0xff]
      %v577 = vmul.f32 %v576, %v574
      %vm578 = vcmask 130048
      %v579 = vsel %vm578, %v575, -inf
      %580 = vmax.xlane.f32.xlu0 %v579
      %v581 = vpop.xlane.xlu0 %580
      %v582 = vsub.f32 %v575, %v581
      %v583 = vmul.f32 %v582, 1.442695
      %v584 = vpow.pop %v583
      %v585 = vsel %vm578, %v584, 0.0
      %586 = vadd.xlane.f32.xlu0 %v585
      %v587 = vpop.xlane.xlu0 %586
      %v588 = vlog2.pop %v587
      %v589 = vmul.f32 %v588, 0.6931472
      %v590 = vsel %vm578, %v577, -inf
      %591 = vmax.xlane.f32.xlu0 %v590
      %v592 = vpop.xlane.xlu0 %591
      %v593 = vsub.f32 %v577, %v592
      %v594 = vmul.f32 %v593, 1.442695
      %v595 = vpow.pop %v594
      %v596 = vsel %vm578, %v595, 0.0
      %597 = vadd.xlane.f32.xlu0 %v596
      %v598 = vpop.xlane.xlu0 %597
      %v599 = vlog2.pop %v598
      %v600 = vmul.f32 %v599, 0.6931472
      %v601 = vrcp.pop %v598
      %v602 = vmul.f32 %v595, %v601
      %v603 = vsub.f32 %v593, %v600
      %v604 = vsub.f32 %v582, %v589
      %v605 = vsub.f32 %v603, %v604
      %v606 = vmul.f32 %v602, %v605
      %v607 = vsel %vm578, %v606, 0.0
      %608 = vadd.xlane.f32.xlu0 %v607
      %v609 = vpop.xlane.xlu0 %608
      %s610 = smul.u32 0, 8
      %v611 = vlaneseq
      %v612 = vshrl.u32 %v611, 7
      %v613 = vstv %s610
      %v614 = vadd.s32 %v613, %v612
      %vm615 = vcmp.lt.s32.totalorder %v614, 2
      %v616 = vsel %vm615, %v568, 0.0
      %v617 = vsel %vm615, %v609, 0.0
      %v618 = vsel %vm558, %v617, 0.0
      %619 = vadd.xlane.f32.xlu0 %v618
      %v620 = vpop.xlane.xlu0 %619
      %v621 = vrot.slane %v620, 4
      %v622 = vadd.f32 %v620, %v621
      %v623 = vrot.slane %v622, 2
      %v624 = vadd.f32 %v622, %v623
      %v625 = vrot.slane %v624, 1
      %v626 = vadd.f32 %v624, %v625
      %s627 = vtos %v626
      %v628 = vstv %s627
      %629 = vst [vmem:[#allocation6] sm:$0x1] %v628
      %v630 = vsel %vm558, %v616, 0.0
      %631 = vadd.xlane.f32.xlu0 %v630
      %v632 = vpop.xlane.xlu0 %631
      %v633 = vrot.slane %v632, 4
      %v634 = vadd.f32 %v632, %v633
      %v635 = vrot.slane %v634, 2
      %v636 = vadd.f32 %v634, %v635
      %v637 = vrot.slane %v636, 1
      %v638 = vadd.f32 %v636, %v637
      %s639 = vtos %v638
      %v640 = vstv %s639
      %641 = vst [vmem:[#allocation8] sm:$0x1] %v640
    $region33: #{tpu_custom_call.1} parent=1 // pred_fallthru
      _
    // Predicated region
    $region34: #{tpu_custom_call.1} parent=1 // pred_check
      _
    $region35: #{tpu_custom_call.1} parent=1 // pred_check_branch
      %643 = sbr.rel (0) target = $region37
    $region36: #{tpu_custom_call.1} parent=1 // pred_region
      %s645 = ssub.s32 16, 16
      %646 = vsyncadd [#allocation7], %s645
      %s648 = sshll.u32 [#allocation6], 4
      %s649 = int_to_ptr.vmem [resolvable:$true] %s648
      %651 = dma.vmem_to_hbm [thread:$0]  %s649, 16, %s5, [#allocation7]
    $region37: #{tpu_custom_call.1} parent=1 // pred_fallthru
      _
    // Predicated region
    $region38: #{tpu_custom_call.1} parent=1 // pred_check
      _
    $region39: #{tpu_custom_call.1} parent=1 // pred_check_branch
      %653 = sbr.rel (0) target = $region41
    $region40: #{tpu_custom_call.1} parent=1 // pred_region
      %s655 = ssub.s32 16, 16
      %656 = vsyncadd [#allocation9], %s655
      %s658 = sshll.u32 [#allocation8], 4
      %s659 = int_to_ptr.vmem [resolvable:$true] %s658
      %661 = dma.vmem_to_hbm [thread:$0]  %s659, 16, %s6, [#allocation9]
    $region41: #{tpu_custom_call.1} parent=1 // pred_fallthru
      _
    // Predicated region
    $region42: #{tpu_custom_call.1} parent=1 // pred_check
      _
    $region43: #{tpu_custom_call.1} parent=1 // pred_check_branch
      %663 = sbr.rel (0) target = $region45
    $region44: #{tpu_custom_call.1} parent=1 // pred_region
      %664 = dma.done [#allocation7], 16
    $region45: #{tpu_custom_call.1} parent=1 // pred_fallthru
      _
    // Predicated region
    $region46: #{tpu_custom_call.1} parent=1 // pred_check
      _
    $region47: #{tpu_custom_call.1} parent=1 // pred_check_branch
      %666 = sbr.rel (0) target = $region49
    $region48: #{tpu_custom_call.1} parent=1 // pred_region
      %667 = dma.done [#allocation9], 16
    $region49: #{tpu_custom_call.1} parent=1 // pred_fallthru
      _
    %668 = vsyncpa [#allocation7], 1
    %669 = vsyncpa [#allocation9], 1

</llo_original>
